<compile_context>
chip_gen: v6e
topology: v6e:2x2x1
jax: 0.10.0
libtpu: 0.0.40
codegen_flags: <defaults>
</compile_context>

<pallas_src>
import functools

import jax
import jax.numpy as jnp
from jax.experimental import pallas as pl
from jax.experimental.pallas import tpu as pltpu


# ---------------------------------------------------------------------------
# Kernel
# ---------------------------------------------------------------------------
def _net_kernel(x_ref, w1_ref, b1_ref, w2_ref, b2_ref, y_ref, *, use_bf16):
    # Feature-major, lane-dense layout (batch on the lane axis):
    #   x:  [F_in , TB]    w1: [H, F_in]   b1: [H, 1]
    #   w2: [F_out, H]     b2: [F_out, 1]  y:  [F_out, TB]
    x = x_ref[...]
    w1 = w1_ref[...]
    w2 = w2_ref[...]
    if use_bf16:
        # bf16 MXU operands (single-pass pushes), f32 accumulation.
        x = x.astype(jnp.bfloat16)
        w1 = w1.astype(jnp.bfloat16)
        w2 = w2.astype(jnp.bfloat16)

    # fc1 + tanh: MXU matmul, f32 VPU bias add, EUP tanh -- all full lane width.
    h = jnp.tanh(jnp.dot(w1, x, preferred_element_type=jnp.float32) + b1_ref[...])
    if use_bf16:
        h = h.astype(jnp.bfloat16)
    # fc2
    y = jnp.dot(w2, h, preferred_element_type=jnp.float32) + b2_ref[...]
    y_ref[...] = y.astype(y_ref.dtype)


# ---------------------------------------------------------------------------
# Feature-major entry point (preferred: no wrapper transposes)
# ---------------------------------------------------------------------------
def net_forward_feature_major(x_t, w1, b1, w2, b2, *, tb=32768, use_bf16=True):
    """x_t: [4, B] f32, w1: [4, H], b1: [H], w2: [H, 2], b2: [2] -> y_t: [2, B] f32."""
    f_in, B = x_t.shape
    H = w1.shape[1]
    f_out = w2.shape[1]

    if tb <= 0 or tb % 128 != 0:
        raise ValueError(f"tb must be a positive multiple of 128, got {tb}")

    # Pick the actual batch tile:
    #  * never larger than the (padded) batch,
    #  * leave >= 2 grid steps when the batch allows it (v7x megacore),
    #  * always a multiple of 128 (lane axis).
    n128 = pl.cdiv(B, 128)            # batch in units of 128 lanes
    tb_units = tb // 128
    if n128 >= 2:
        tb_units = max(1, min(tb_units, n128 // 2))
    else:
        tb_units = 1
    tb = tb_units * 128
    n_tiles = pl.cdiv(n128, tb_units)
    Bp = n_tiles * tb

    # VMEM budget @ tb=32768, f32: x block [4->8, tb] double-buffered ~2 MiB,
    # y block ~2 MiB, hidden [H_pad, tb] ~2 MiB (H<=32) -> well inside the
    # 16 MiB v5e scoped default; no vmem_limit override needed.
    x_p = x_t if Bp == B else jnp.pad(x_t, ((0, 0), (0, Bp - B)))
    w1_t = w1.T                                      # [H, F_in]
    b1_c = b1.reshape(H, 1).astype(jnp.float32)      # [H, 1]
    w2_t = w2.T                                      # [F_out, H]
    b2_c = b2.reshape(f_out, 1).astype(jnp.float32)  # [F_out, 1]

    cost = pl.CostEstimate(
        flops=2 * Bp * (f_in * H + H * f_out),
        transcendentals=Bp * H,
        bytes_accessed=4 * (Bp * (f_in + f_out) + f_in * H + H * f_out + H + f_out),
    )

    y_t = pl.pallas_call(
        functools.partial(_net_kernel, use_bf16=use_bf16),
        out_shape=jax.ShapeDtypeStruct((f_out, Bp), jnp.float32),
        grid=(n_tiles,),
        in_specs=[
            # streamed: one lane-dense batch tile of x per grid step
            pl.BlockSpec((f_in, tb), lambda i: (0, i)),
            # grid-invariant weights/biases (constant block index => VMEM-resident)
            pl.BlockSpec((H, f_in), lambda i: (0, 0)),
            pl.BlockSpec((H, 1), lambda i: (0, 0)),
            pl.BlockSpec((f_out, H), lambda i: (0, 0)),
            pl.BlockSpec((f_out, 1), lambda i: (0, 0)),
        ],
        out_specs=pl.BlockSpec((f_out, tb), lambda i: (0, i)),
        compiler_params=pltpu.CompilerParams(
            dimension_semantics=("parallel",),
        ),
        cost_estimate=cost,
    )(x_p, w1_t, b1_c, w2_t, b2_c)

    return y_t if Bp == B else y_t[:, :B]


# ---------------------------------------------------------------------------
# Row-major wrapper matching the PyTorch interface: x [B, 4] -> y [B, 2]
# ---------------------------------------------------------------------------
def net_forward(x, w1, b1, w2, b2, *, tb=32768, use_bf16=True):
    # Prefer net_forward_feature_major for lane-dense producers/consumers; the
    # transpose pair here adds wrapper HBM traffic on top of the kernel's.
    y_t = net_forward_feature_major(x.T, w1, b1, w2, b2, tb=tb, use_bf16=use_bf16)
    return y_t.T


def init_params(key, input_units=4, hidden_units=10, output_units=2):
    """Deterministic init mimicking PyTorch nn.Linear defaults (U(-1/sqrt(fan_in), +))."""
    k1, k2, k3, k4 = jax.random.split(key, 4)
    bound1 = 1.0 / jnp.sqrt(input_units)
    bound2 = 1.0 / jnp.sqrt(hidden_units)
    # weights stored as [in, out] (transpose of torch's [out, in]); same math
    w1 = jax.random.uniform(k1, (input_units, hidden_units), jnp.float32, -bound1, bound1)
    b1 = jax.random.uniform(k2, (hidden_units,), jnp.float32, -bound1, bound1)
    w2 = jax.random.uniform(k3, (hidden_units, output_units), jnp.float32, -bound2, bound2)
    b2 = jax.random.uniform(k4, (output_units,), jnp.float32, -bound2, bound2)
    return w1, b1, w2, b2


if __name__ == "__main__":
    key = jax.random.PRNGKey(0)
    kx, kp = jax.random.split(key)

    # Module-consistent small shapes; B not a multiple of 128 so padding and a
    # multi-step (megacore-shardable) grid are both exercised.
    B, input_units, hidden_units, output_units = 1000, 4, 10, 2

    x = jax.random.normal(kx, (B, input_units), jnp.float32)
    w1, b1, w2, b2 = init_params(kp, input_units, hidden_units, output_units)

    y = net_forward(x, w1, b1, w2, b2)
    y = jax.block_until_ready(y)
    assert y.shape == (B, output_units)

    # Reference with matching bf16 MXU operands / f32 accumulation (same math
    # path as the kernel).
    xb, w1b, w2b = (a.astype(jnp.bfloat16) for a in (x, w1, w2))
    h_ref = jnp.tanh(jnp.dot(xb, w1b, preferred_element_type=jnp.float32) + b1)
    y_ref = jnp.dot(h_ref.astype(jnp.bfloat16), w2b,
                    preferred_element_type=jnp.float32) + b2
    assert jnp.allclose(y, y_ref, atol=1e-3, rtol=1e-3)

    # Sanity vs. the full-f32 PyTorch math (looser: bf16 MXU operands).
    y_f32 = jnp.dot(jnp.tanh(jnp.dot(x, w1) + b1), w2) + b2
    assert jnp.allclose(y, y_f32, atol=5e-2, rtol=5e-2)

    print("KERNEL_OK")
</pallas_src>

<mosaic_0001>
module attributes {stable_mosaic.version = 11 : i64} {
  func.func @_net_kernel(%arg0: i32, %arg1: memref<4x512xf32, #tpu.memory_space<vmem>>, %arg2: memref<10x4xf32, #tpu.memory_space<vmem>>, %arg3: memref<10x1xf32, #tpu.memory_space<vmem>>, %arg4: memref<2x10xf32, #tpu.memory_space<vmem>>, %arg5: memref<2x1xf32, #tpu.memory_space<vmem>>, %arg6: memref<2x512xf32, #tpu.memory_space<vmem>>) attributes {dimension_semantics = [#tpu.dimension_semantics<parallel>], iteration_bounds = array<i64: 2>, scalar_prefetch = 0 : i64, scratch_operands = 0 : i64, tpu.core_type = #tpu.core_type<tc>, window_params = [{transform_indices = @transform_0, window_bounds = array<i64: 4, 512>}, {pipeline_mode = #tpu.pipeline_mode<synchronous>, transform_indices = @transform_1, window_bounds = array<i64: 10, 4>}, {pipeline_mode = #tpu.pipeline_mode<synchronous>, transform_indices = @transform_2, window_bounds = array<i64: 10, 1>}, {pipeline_mode = #tpu.pipeline_mode<synchronous>, transform_indices = @transform_3, window_bounds = array<i64: 2, 10>}, {pipeline_mode = #tpu.pipeline_mode<synchronous>, transform_indices = @transform_4, window_bounds = array<i64: 2, 1>}, {transform_indices = @transform_5, window_bounds = array<i64: 2, 512>}]} {
    %c0 = arith.constant 0 : index
    %c0_0 = arith.constant 0 : index
    %0 = vector.load %arg1[%c0, %c0_0] : memref<4x512xf32, #tpu.memory_space<vmem>>, vector<4x512xf32>
    %c0_1 = arith.constant 0 : index
    %c0_2 = arith.constant 0 : index
    %1 = vector.load %arg2[%c0_1, %c0_2] : memref<10x4xf32, #tpu.memory_space<vmem>>, vector<10x4xf32>
    %c0_3 = arith.constant 0 : index
    %c0_4 = arith.constant 0 : index
    %2 = vector.load %arg4[%c0_3, %c0_4] : memref<2x10xf32, #tpu.memory_space<vmem>>, vector<2x10xf32>
    %3 = arith.truncf %0 : vector<4x512xf32> to vector<4x512xbf16>
    %4 = arith.truncf %1 : vector<10x4xf32> to vector<10x4xbf16>
    %5 = arith.truncf %2 : vector<2x10xf32> to vector<2x10xbf16>
    %cst = arith.constant dense<0.000000e+00> : vector<10x512xf32>
    %6 = tpu.matmul %4, %3, %cst {dimension_numbers = #tpu.dot_dimension_numbers<[1], [0], [0], [1], [0, 0, 1, 1], [], []>} : vector<10x4xbf16>, vector<4x512xbf16>, vector<10x512xf32> -> vector<10x512xf32>
    %c0_5 = arith.constant 0 : index
    %c0_6 = arith.constant 0 : index
    %7 = vector.load %arg3[%c0_5, %c0_6] : memref<10x1xf32, #tpu.memory_space<vmem>>, vector<10x1xf32>
    %8 = vector.broadcast %7 : vector<10x1xf32> to vector<10x512xf32>
    %9 = arith.addf %6, %8 : vector<10x512xf32>
    %10 = math.tanh %9 : vector<10x512xf32>
    %11 = arith.truncf %10 : vector<10x512xf32> to vector<10x512xbf16>
    %cst_7 = arith.constant dense<0.000000e+00> : vector<2x512xf32>
    %12 = tpu.matmul %5, %11, %cst_7 {dimension_numbers = #tpu.dot_dimension_numbers<[1], [0], [0], [1], [0, 0, 1, 1], [], []>} : vector<2x10xbf16>, vector<10x512xbf16>, vector<2x512xf32> -> vector<2x512xf32>
    %c0_8 = arith.constant 0 : index
    %c0_9 = arith.constant 0 : index
    %13 = vector.load %arg5[%c0_8, %c0_9] : memref<2x1xf32, #tpu.memory_space<vmem>>, vector<2x1xf32>
    %14 = vector.broadcast %13 : vector<2x1xf32> to vector<2x512xf32>
    %15 = arith.addf %12, %14 : vector<2x512xf32>
    %c0_10 = arith.constant 0 : index
    %c0_11 = arith.constant 0 : index
    %16 = vector.load %arg6[%c0_10, %c0_11] : memref<2x512xf32, #tpu.memory_space<vmem>>, vector<2x512xf32>
    tpu.vector_store %arg6[%c0_10, %c0_11], %15 {strides = array<i32>} : memref<2x512xf32, #tpu.memory_space<vmem>>, vector<2x512xf32>,
    return
  }
  func.func @transform_0(%arg0: i32) -> (i32, i32) {
    %c0_i32 = arith.constant 0 : i32
    %c0_i32_0 = arith.constant 0 : i32
    return %c0_i32, %arg0 : i32, i32
  }
  func.func @transform_1(%arg0: i32) -> (i32, i32) {
    %c0_i32 = arith.constant 0 : i32
    %c0_i32_0 = arith.constant 0 : i32
    %c0_i32_1 = arith.constant 0 : i32
    return %c0_i32, %c0_i32_0 : i32, i32
  }
  func.func @transform_2(%arg0: i32) -> (i32, i32) {
    %c0_i32 = arith.constant 0 : i32
    %c0_i32_0 = arith.constant 0 : i32
    %c0_i32_1 = arith.constant 0 : i32
    return %c0_i32, %c0_i32_0 : i32, i32
  }
  func.func @transform_3(%arg0: i32) -> (i32, i32) {
    %c0_i32 = arith.constant 0 : i32
    %c0_i32_0 = arith.constant 0 : i32
    %c0_i32_1 = arith.constant 0 : i32
    return %c0_i32, %c0_i32_0 : i32, i32
  }
  func.func @transform_4(%arg0: i32) -> (i32, i32) {
    %c0_i32 = arith.constant 0 : i32
    %c0_i32_0 = arith.constant 0 : i32
    %c0_i32_1 = arith.constant 0 : i32
    return %c0_i32, %c0_i32_0 : i32, i32
  }
  func.func @transform_5(%arg0: i32) -> (i32, i32) {
    %c0_i32 = arith.constant 0 : i32
    %c0_i32_0 = arith.constant 0 : i32
    return %c0_i32, %arg0 : i32, i32
  }
}

</mosaic_0001>

<llo_original>
// kernel: tpu_custom_call.1
$region0: #{tpu_custom_call.1}
  #allocation0 [shape = 'u32[]', space=smem, size = 0x4, offset = 0x4, fixed_abs, tag = 'smem constant byte address 0x4 - core index']
  #allocation1 [shape = 'u32[144,128]{1,0:T(1,128)}', space=vmem, size = 0x12000, scoped, tag = 'internal scratch']
  %s0 = inlined_call_operand.vmem [shape: f32[4,1024], index: 0, kind: input, shape index: {}]
  %s1 = inlined_call_operand.vmem [shape: f32[10,4], index: 1, kind: input, shape index: {}]
  %s2 = inlined_call_operand.vmem [shape: f32[10,1], index: 2, kind: input, shape index: {}]
  %s3 = inlined_call_operand.vmem [shape: f32[2,10], index: 3, kind: input, shape index: {}]
  %s4 = inlined_call_operand.vmem [shape: f32[2,1], index: 4, kind: input, shape index: {}]
  %s5 = inlined_call_operand.hbm [shape: f32[2,1024], index: 5, kind: output, shape index: {}]
  %s6 = sld [smem:[#allocation0]]
  $region53: #{tpu_custom_call.1} parent=0
    _
  %s8 = ssub.s32 1, %s6
  %s9 = scalar_select 0, %s8, %s6
  $region1: #{tpu_custom_call.1} parent=0
    #allocation2 [shape = 'u8[8192]{0}', space=vmem, size = 0x2000, scoped, tag = 'output window, operand 0']
    #allocation3 [shape = 's32[2]{0}', space=sflag, size = 0x8, scoped, tag = 'scoped memory for tpu_custom_call.1']
    %10 = vsyncpa [#allocation3], 0
    %s11 = scalar_lea.sflag [#allocation3], 1
    %12 = vsyncpa %s11, 0
    loop: start=0, step=1, limit=4
    $region2: #{tpu_custom_call.1} parent=1 // loop_pre_header
      _
    $region3: #{tpu_custom_call.1} parent=1 // loop_header
      %s14 = sphi 0, %s18
      %p15 = scmp.ge.s32.totalorder %s14, 4
      %s24 = sphi 0, %s26
      %s27 = sphi 0, %s24
      %s28 = sphi 0, %s27
      %s44 = sphi 0, %s28
      %s48 = sphi 0, %s48
      %s50 = sphi 0, %s48
      %s51 = sphi 0, %s50
      %s65 = sphi 0, %s51
      %s69 = sphi 0, %s69
      %s71 = sphi 0, %s69
      %s72 = sphi 0, %s71
      %s86 = sphi 0, %s72
      %s90 = sphi 0, %s90
      %s92 = sphi 0, %s90
      %s93 = sphi 0, %s92
      %s107 = sphi 0, %s93
      %s111 = sphi 0, %s111
      %s113 = sphi 0, %s111
      %s114 = sphi 0, %s113
      %s128 = sphi 0, %s114
      %s134 = sphi 0, %s136
      %s137 = sphi 0, %s134
      %s138 = sphi 0, %s137
      %s154 = sphi 0, %s138
    $region4: #{tpu_custom_call.1} parent=1 // loop_header_branch
      %17 = sbr.rel (%p15) target = $region8
    $region5: #{tpu_custom_call.1} parent=1 // loop_body
      %s19 = ssub.s32 %s14, 1
      %s20 = ssub.s32 %s14, 2
      %s21 = sadd.s32 %s14, 1
      %s22 = ssub.s32 %s14, %s21
      %p23 = scmp.eq.s32.totalorder %s22, 0
      %s25 = sadd.s32 %s24, 1
      %s26 = scalar_select %p23, %s24, %s25
      %p29 = pneg %p23
      %p30 = scmp.eq.s32.totalorder %s14, 1
      %p31 = por %p29, %p30
      %p32 = scmp.ne.s32.totalorder %s24, %s27
      %p33 = scmp.eq.s32.totalorder %s14, 0
      %p34 = por %p32, %p33
      %p35 = scmp.ne.s32.totalorder %s24, %s27
      %p36 = scmp.eq.s32.totalorder %s19, 1
      %p37 = por %p35, %p36
      %p38 = scmp.ne.s32.totalorder %s27, %s28
      %p39 = scmp.eq.s32.totalorder %s19, 0
      %p40 = por %p38, %p39
      %p41 = scmp.ne.s32.totalorder %s27, %s28
      %p42 = scmp.eq.s32.totalorder %s20, 1
      %p43 = por %p41, %p42
      %p45 = scmp.ne.s32.totalorder %s28, %s44
      %p46 = scmp.eq.s32.totalorder %s20, 0
      %p47 = por %p45, %p46
      %s49 = sadd.s32 %s48, 1
      %p52 = scmp.eq.s32.totalorder %s14, 1
      %p53 = scmp.ne.s32.totalorder %s48, %s50
      %p54 = scmp.eq.s32.totalorder %s14, 0
      %p55 = por %p53, %p54
      %p56 = scmp.ne.s32.totalorder %s48, %s50
      %p57 = scmp.eq.s32.totalorder %s19, 1
      %p58 = por %p56, %p57
      %p59 = scmp.ne.s32.totalorder %s50, %s51
      %p60 = scmp.eq.s32.totalorder %s19, 0
      %p61 = por %p59, %p60
      %p62 = scmp.ne.s32.totalorder %s50, %s51
      %p63 = scmp.eq.s32.totalorder %s20, 1
      %p64 = por %p62, %p63
      %p66 = scmp.ne.s32.totalorder %s51, %s65
      %p67 = scmp.eq.s32.totalorder %s20, 0
      %p68 = por %p66, %p67
      %s70 = sadd.s32 %s69, 1
      %p73 = scmp.eq.s32.totalorder %s14, 1
      %p74 = scmp.ne.s32.totalorder %s69, %s71
      %p75 = scmp.eq.s32.totalorder %s14, 0
      %p76 = por %p74, %p75
      %p77 = scmp.ne.s32.totalorder %s69, %s71
      %p78 = scmp.eq.s32.totalorder %s19, 1
      %p79 = por %p77, %p78
      %p80 = scmp.ne.s32.totalorder %s71, %s72
      %p81 = scmp.eq.s32.totalorder %s19, 0
      %p82 = por %p80, %p81
      %p83 = scmp.ne.s32.totalorder %s71, %s72
      %p84 = scmp.eq.s32.totalorder %s20, 1
      %p85 = por %p83, %p84
      %p87 = scmp.ne.s32.totalorder %s72, %s86
      %p88 = scmp.eq.s32.totalorder %s20, 0
      %p89 = por %p87, %p88
      %s91 = sadd.s32 %s90, 1
      %p94 = scmp.eq.s32.totalorder %s14, 1
      %p95 = scmp.ne.s32.totalorder %s90, %s92
      %p96 = scmp.eq.s32.totalorder %s14, 0
      %p97 = por %p95, %p96
      %p98 = scmp.ne.s32.totalorder %s90, %s92
      %p99 = scmp.eq.s32.totalorder %s19, 1
      %p100 = por %p98, %p99
      %p101 = scmp.ne.s32.totalorder %s92, %s93
      %p102 = scmp.eq.s32.totalorder %s19, 0
      %p103 = por %p101, %p102
      %p104 = scmp.ne.s32.totalorder %s92, %s93
      %p105 = scmp.eq.s32.totalorder %s20, 1
      %p106 = por %p104, %p105
      %p108 = scmp.ne.s32.totalorder %s93, %s107
      %p109 = scmp.eq.s32.totalorder %s20, 0
      %p110 = por %p108, %p109
      %s112 = sadd.s32 %s111, 1
      %p115 = scmp.eq.s32.totalorder %s14, 1
      %p116 = scmp.ne.s32.totalorder %s111, %s113
      %p117 = scmp.eq.s32.totalorder %s14, 0
      %p118 = por %p116, %p117
      %p119 = scmp.ne.s32.totalorder %s111, %s113
      %p120 = scmp.eq.s32.totalorder %s19, 1
      %p121 = por %p119, %p120
      %p122 = scmp.ne.s32.totalorder %s113, %s114
      %p123 = scmp.eq.s32.totalorder %s19, 0
      %p124 = por %p122, %p123
      %p125 = scmp.ne.s32.totalorder %s113, %s114
      %p126 = scmp.eq.s32.totalorder %s20, 1
      %p127 = por %p125, %p126
      %p129 = scmp.ne.s32.totalorder %s114, %s128
      %p130 = scmp.eq.s32.totalorder %s20, 0
      %p131 = por %p129, %p130
      %s132 = ssub.s32 %s14, %s21
      %p133 = scmp.eq.s32.totalorder %s132, 0
      %s135 = sadd.s32 %s134, 1
      %s136 = scalar_select %p133, %s134, %s135
      %p139 = pneg %p133
      %p140 = scmp.eq.s32.totalorder %s14, 1
      %p141 = por %p139, %p140
      %p142 = scmp.ne.s32.totalorder %s134, %s137
      %p143 = scmp.eq.s32.totalorder %s14, 0
      %p144 = por %p142, %p143
      %p145 = scmp.ne.s32.totalorder %s134, %s137
      %p146 = scmp.eq.s32.totalorder %s19, 1
      %p147 = por %p145, %p146
      %p148 = scmp.ne.s32.totalorder %s137, %s138
      %p149 = scmp.eq.s32.totalorder %s19, 0
      %p150 = por %p148, %p149
      %p151 = scmp.ne.s32.totalorder %s137, %s138
      %p152 = scmp.eq.s32.totalorder %s20, 1
      %p153 = por %p151, %p152
      %p155 = scmp.ne.s32.totalorder %s138, %s154
      %p156 = scmp.eq.s32.totalorder %s20, 0
      %p157 = por %p155, %p156
      %p158 = scmp.le.s32.totalorder 1, %s14
      %p159 = scmp.lt.s32.totalorder %s14, 3
      %p160 = pnand %p158, %p159
      %p161 = pneg %p160
      // Predicated region
      $region9: #{tpu_custom_call.1} parent=5 // pred_check
        _
      $region10: #{tpu_custom_call.1} parent=5 // pred_check_branch
        %163 = sbr.rel (%p160) target = $region12
      $region11: #{tpu_custom_call.1} parent=5 // pred_region
        %s164 = ssub.s32 %s14, 1
        // Predicated region
        $region13: #{tpu_custom_call.1} parent=11 // pred_check
          %p165 = pneg %p61
        $region14: #{tpu_custom_call.1} parent=11 // pred_check_branch
          %167 = sbr.rel (%p165) target = $region16
        $region15: #{tpu_custom_call.1} parent=11 // pred_region
          _
        $region16: #{tpu_custom_call.1} parent=11 // pred_fallthru
          _
        // Predicated region
        $region17: #{tpu_custom_call.1} parent=11 // pred_check
          %p168 = pneg %p82
        $region18: #{tpu_custom_call.1} parent=11 // pred_check_branch
          %170 = sbr.rel (%p168) target = $region20
        $region19: #{tpu_custom_call.1} parent=11 // pred_region
          _
        $region20: #{tpu_custom_call.1} parent=11 // pred_fallthru
          _
        // Predicated region
        $region21: #{tpu_custom_call.1} parent=11 // pred_check
          %p171 = pneg %p103
        $region22: #{tpu_custom_call.1} parent=11 // pred_check_branch
          %173 = sbr.rel (%p171) target = $region24
        $region23: #{tpu_custom_call.1} parent=11 // pred_region
          _
        $region24: #{tpu_custom_call.1} parent=11 // pred_fallthru
          _
        // Predicated region
        $region25: #{tpu_custom_call.1} parent=11 // pred_check
          %p174 = pneg %p124
        $region26: #{tpu_custom_call.1} parent=11 // pred_check_branch
          %176 = sbr.rel (%p174) target = $region28
        $region27: #{tpu_custom_call.1} parent=11 // pred_region
          _
        $region28: #{tpu_custom_call.1} parent=11 // pred_fallthru
          _
      $region12: #{tpu_custom_call.1} parent=5 // pred_fallthru
        _
      %p177 = scmp.lt.s32.totalorder %s14, 2
      // Predicated region
      $region29: #{tpu_custom_call.1} parent=5 // pred_check
        %p178 = pneg %p177
      $region30: #{tpu_custom_call.1} parent=5 // pred_check_branch
        %180 = sbr.rel (%p178) target = $region32
      $region31: #{tpu_custom_call.1} parent=5 // pred_region
        // Predicated region
        $region33: #{tpu_custom_call.1} parent=31 // pred_check
          %p181 = pneg %p34
        $region34: #{tpu_custom_call.1} parent=31 // pred_check_branch
          %183 = sbr.rel (%p181) target = $region36
        $region35: #{tpu_custom_call.1} parent=31 // pred_region
          %s184 = smul.u32 4, %s14
          %p185 = scmp.lt.s32.totalorder %s184, 7
          %s186 = scalar_select %p185, %s184, 7
          %s187 = smul.addr %s186, 4
          %s188 = scalar_lea.vmem %s0, %s187
          %s189 = smul.u32 4, %s14
        $region36: #{tpu_custom_call.1} parent=31 // pred_fallthru
          _
      $region32: #{tpu_custom_call.1} parent=5 // pred_fallthru
        _
      %p190 = scmp.le.s32.totalorder 1, %s14
      %p191 = scmp.lt.s32.totalorder %s14, 3
      %p192 = pnand %p190, %p191
      %p193 = pneg %p192
      // Predicated region
      $region37: #{tpu_custom_call.1} parent=5 // pred_check
        _
      $region38: #{tpu_custom_call.1} parent=5 // pred_check_branch
        %195 = sbr.rel (%p192) target = $region40
      $region39: #{tpu_custom_call.1} parent=5 // pred_region
        %s196 = ssub.s32 %s14, 1
        %s197 = smul.u32 4, %s19
        %p198 = scmp.lt.s32.totalorder %s197, 7
        %s199 = scalar_select %p198, %s197, 7
        %s200 = smul.addr %s199, 4
        %s201 = scalar_lea.vmem %s0, %s200
        %p202 = pneg %p40
        %p203 = pneg %p37
        %p204 = pneg %p61
        %p205 = pneg %p58
        %p206 = pneg %p82
        %p207 = pneg %p79
        %p208 = pneg %p103
        %p209 = pneg %p100
        %p210 = pneg %p124
        %p211 = pneg %p121
        %p212 = pneg %p150
        %p213 = pneg %p147
        %s214 = sand.u32 %s137, 1
        %s215 = scalar_lea.sflag [#allocation3], %s214
        %s216 = sand.u32 %s137, 1
        %s217 = smul.addr %s216, 8
        %s218 = scalar_lea.vmem [#allocation2], %s217
        %s219 = smul.u32 4, %s19
        %p220 = scmp.lt.s32.totalorder %s219, 7
        %s221 = scalar_select %p220, %s219, 7
        %s222 = smul.addr %s221, 4
        %s223 = scalar_lea.vmem %s0, %s222
        %s224 = smul.u32 4, %s19
        %s225 = smul.u32 4, %s19
        %v227 = vld [vmem:[%s223] sm:$0xff]
        %v228 = vld [vmem:[%s223 + $0x8] sm:$0xff]
        %v229 = vld [vmem:[%s1] sm:$0xff]
        %v230 = vld [vmem:[%s1 + $0x8] sm:$0x3]
        %v231 = vld [vmem:[%s3] sm:$0x3]
        %v234 = vcombine.high %v227, %v227
        %v235 = vcombine.high %v228, %v228
        %v238 = vpack.c.bf16 %v227, %v227
        %v239 = vpack.c.bf16 %v234, %v234
        %v240 = vpack.c.bf16 %v228, %v228
        %v241 = vpack.c.bf16 %v235, %v235
        %v242 = vpack.c.bf16 %v230, %v229
        %v243 = vpack.c.bf16 %v231, %v231
        %v244 = vld [vmem:[%s2] sm:$0xff]
        %v245 = vld [vmem:[%s2 + $0x8] sm:$0x3]
        %247 = vset.pattern.permute.xlu0 0
        %248 = vperm.xlu0 %247, %v244
        %v249 = vpop.permute.xlu0 %248
        %252 = vset.pattern.permute.xlu0 0
        %253 = vperm.xlu0 %252, %v245
        %v254 = vpop.permute.xlu0 %253
        %vm256 = vcmask 31744
        %v258 = vsel %vm256, %v242, 0
        %vm260 = vcmask 1041408
        %v262 = vsel %vm260, %v238, 0
        %v265 = vsel %vm260, %v239, 0
        %v268 = vsel %vm260, %v240, 0
        %v271 = vsel %vm260, %v241, 0
        %273 = vmatprep.subr.bf16.mxu0 0
        %274 = vmatpush1.bf16.msra.mxu0 0
        %275 = vmatprep.subr.bf16.mxu0 0
        %276 = vmatpush1.bf16.msra.mxu0 0
        %277 = vmatprep.subr.bf16.mxu0 0
        %278 = vmatpush1.bf16.msra.mxu0 0
        %279 = vmatprep.subr.bf16.mxu0 0
        %280 = vmatpush1.bf16.msra.mxu0 0
        %281 = vmatprep.subr.bf16.mxu0 0
        %282 = vmatpush1.bf16.msra.mxu0 0
        %283 = vmatprep.subr.bf16.mxu0 0
        %284 = vmatpush1.bf16.msra.mxu0 0
        %285 = vmatprep.subr.bf16.mxu0 0
        %286 = vmatpush1.bf16.msra.mxu0 0
        %287 = vmatprep.subr.bf16.mxu0 %v265
        %288 = vmatpush1.bf16.msra.mxu0 %v262
        %289 = vmatprep.subr.bf16.mxu0 0
        %290 = vmatpush2.bf16.msra.mxu0 0
        %291 = vmatprep.subr.bf16.mxu0 0
        %292 = vmatpush2.bf16.msra.mxu0 0
        %293 = vmatprep.subr.bf16.mxu0 0
        %294 = vmatpush2.bf16.msra.mxu0 0
        %295 = vmatprep.subr.bf16.mxu0 0
        %296 = vmatpush2.bf16.msra.mxu0 0
        %297 = vmatprep.subr.bf16.mxu0 0
        %298 = vmatpush2.bf16.msra.mxu0 0
        %299 = vmatprep.subr.bf16.mxu0 0
        %300 = vmatpush2.bf16.msra.mxu0 0
        %301 = vmatprep.subr.bf16.mxu0 0
        %302 = vmatpush2.bf16.msra.mxu0 0
        %303 = vmatprep.subr.bf16.mxu0 0
        %304 = vmatpush2.bf16.msra.mxu0 0
        %305 = vmatprep.mubr.bf16.mxu0 0
        %306 = vmatmul.mubr.bf16.gmra.mxu0 %v258
        %v307 = vpop.f32.mrf.mxu0
        %v308 = vadd.f32 %v249, %v307
        %v309 = vpop.f32.mrf.mxu0
        %v310 = vadd.f32 %v249, %v309
        %v311 = vpop.f32.mrf.mxu0
        %v312 = vadd.f32 %v254, %v311
        %v313 = vpop.f32.mrf.mxu0
        %v314 = vadd.f32 %v254, %v313
        %315 = vdwg.mxu0
        %316 = vmatprep.subr.bf16.mxu0 0
        %317 = vmatpush1.bf16.msra.mxu0 0
        %318 = vmatprep.subr.bf16.mxu0 0
        %319 = vmatpush1.bf16.msra.mxu0 0
        %320 = vmatprep.subr.bf16.mxu0 0
        %321 = vmatpush1.bf16.msra.mxu0 0
        %322 = vmatprep.subr.bf16.mxu0 0
        %323 = vmatpush1.bf16.msra.mxu0 0
        %324 = vmatprep.subr.bf16.mxu0 0
        %325 = vmatpush1.bf16.msra.mxu0 0
        %326 = vmatprep.subr.bf16.mxu0 0
        %327 = vmatpush1.bf16.msra.mxu0 0
        %328 = vmatprep.subr.bf16.mxu0 0
        %329 = vmatpush1.bf16.msra.mxu0 0
        %330 = vmatprep.subr.bf16.mxu0 %v271
        %331 = vmatpush1.bf16.msra.mxu0 %v268
        %332 = vmatprep.subr.bf16.mxu0 0
        %333 = vmatpush2.bf16.msra.mxu0 0
        %334 = vmatprep.subr.bf16.mxu0 0
        %335 = vmatpush2.bf16.msra.mxu0 0
        %336 = vmatprep.subr.bf16.mxu0 0
        %337 = vmatpush2.bf16.msra.mxu0 0
        %338 = vmatprep.subr.bf16.mxu0 0
        %339 = vmatpush2.bf16.msra.mxu0 0
        %340 = vmatprep.subr.bf16.mxu0 0
        %341 = vmatpush2.bf16.msra.mxu0 0
        %342 = vmatprep.subr.bf16.mxu0 0
        %343 = vmatpush2.bf16.msra.mxu0 0
        %344 = vmatprep.subr.bf16.mxu0 0
        %345 = vmatpush2.bf16.msra.mxu0 0
        %346 = vmatprep.subr.bf16.mxu0 0
        %347 = vmatpush2.bf16.msra.mxu0 0
        %348 = vmatprep.mubr.bf16.mxu0 0
        %349 = vmatmul.mubr.bf16.gmra.mxu0 %v258
        %v350 = vpop.f32.mrf.mxu0
        %v351 = vadd.f32 %v249, %v350
        %v352 = vpop.f32.mrf.mxu0
        %v353 = vadd.f32 %v249, %v352
        %v354 = vpop.f32.mrf.mxu0
        %v355 = vadd.f32 %v254, %v354
        %v356 = vpop.f32.mrf.mxu0
        %v357 = vadd.f32 %v254, %v356
        %358 = vdwg.mxu0
        %v359 = vtanh.pop %v308
        %v360 = vtanh.pop %v310
        %v361 = vtanh.pop %v351
        %v362 = vtanh.pop %v353
        %v363 = vtanh.pop %v312
        %v364 = vtanh.pop %v314
        %v365 = vtanh.pop %v355
        %v366 = vtanh.pop %v357
        %v367 = vpack.c.bf16 %v363, %v359
        %v368 = vpack.c.bf16 %v364, %v360
        %v369 = vpack.c.bf16 %v365, %v361
        %v370 = vpack.c.bf16 %v366, %v362
        %v371 = vld [vmem:[%s4] sm:$0x3]
        %373 = vset.pattern.permute.xlu0 0
        %374 = vperm.xlu0 %373, %v371
        %v375 = vpop.permute.xlu0 %374
        %vm377 = vcmask 80896
        %v379 = vsel %vm377, %v243, 0
        %vm381 = vcmask 1044480
        %v383 = vsel %vm381, %v367, 0
        %v386 = vsel %vm381, %v368, 0
        %v389 = vsel %vm381, %v369, 0
        %v392 = vsel %vm381, %v370, 0
        %394 = vmatprep.subr.bf16.mxu0 0
        %395 = vmatpush1.bf16.msra.mxu0 0
        %396 = vmatprep.subr.bf16.mxu0 0
        %397 = vmatpush1.bf16.msra.mxu0 0
        %398 = vmatprep.subr.bf16.mxu0 0
        %399 = vmatpush1.bf16.msra.mxu0 0
        %400 = vmatprep.subr.bf16.mxu0 0
        %401 = vmatpush1.bf16.msra.mxu0 0
        %402 = vmatprep.subr.bf16.mxu0 0
        %403 = vmatpush1.bf16.msra.mxu0 0
        %404 = vmatprep.subr.bf16.mxu0 0
        %405 = vmatpush1.bf16.msra.mxu0 0
        %406 = vmatprep.subr.bf16.mxu0 0
        %407 = vmatpush1.bf16.msra.mxu0 0
        %408 = vmatprep.subr.bf16.mxu0 %v386
        %409 = vmatpush1.bf16.msra.mxu0 %v383
        %410 = vmatprep.subr.bf16.mxu0 0
        %411 = vmatpush2.bf16.msra.mxu0 0
        %412 = vmatprep.subr.bf16.mxu0 0
        %413 = vmatpush2.bf16.msra.mxu0 0
        %414 = vmatprep.subr.bf16.mxu0 0
        %415 = vmatpush2.bf16.msra.mxu0 0
        %416 = vmatprep.subr.bf16.mxu0 0
        %417 = vmatpush2.bf16.msra.mxu0 0
        %418 = vmatprep.subr.bf16.mxu0 0
        %419 = vmatpush2.bf16.msra.mxu0 0
        %420 = vmatprep.subr.bf16.mxu0 0
        %421 = vmatpush2.bf16.msra.mxu0 0
        %422 = vmatprep.subr.bf16.mxu0 0
        %423 = vmatpush2.bf16.msra.mxu0 0
        %424 = vmatprep.subr.bf16.mxu0 0
        %425 = vmatpush2.bf16.msra.mxu0 0
        %426 = vmatprep.mubr.bf16.mxu0 0
        %427 = vmatmul.mubr.bf16.gmra.mxu0 %v379
        %v428 = vpop.f32.mrf.mxu0
        %v429 = vadd.f32 %v375, %v428
        %v430 = vpop.f32.mrf.mxu0
        %v431 = vadd.f32 %v375, %v430
        %v432 = vpop.f32.mrf.mxu0
        %v433 = vpop.f32.mrf.mxu0
        %434 = vdwg.mxu0
        %435 = vmatprep.subr.bf16.mxu0 0
        %436 = vmatpush1.bf16.msra.mxu0 0
        %437 = vmatprep.subr.bf16.mxu0 0
        %438 = vmatpush1.bf16.msra.mxu0 0
        %439 = vmatprep.subr.bf16.mxu0 0
        %440 = vmatpush1.bf16.msra.mxu0 0
        %441 = vmatprep.subr.bf16.mxu0 0
        %442 = vmatpush1.bf16.msra.mxu0 0
        %443 = vmatprep.subr.bf16.mxu0 0
        %444 = vmatpush1.bf16.msra.mxu0 0
        %445 = vmatprep.subr.bf16.mxu0 0
        %446 = vmatpush1.bf16.msra.mxu0 0
        %447 = vmatprep.subr.bf16.mxu0 0
        %448 = vmatpush1.bf16.msra.mxu0 0
        %449 = vmatprep.subr.bf16.mxu0 %v392
        %450 = vmatpush1.bf16.msra.mxu0 %v389
        %451 = vmatprep.subr.bf16.mxu0 0
        %452 = vmatpush2.bf16.msra.mxu0 0
        %453 = vmatprep.subr.bf16.mxu0 0
        %454 = vmatpush2.bf16.msra.mxu0 0
        %455 = vmatprep.subr.bf16.mxu0 0
        %456 = vmatpush2.bf16.msra.mxu0 0
        %457 = vmatprep.subr.bf16.mxu0 0
        %458 = vmatpush2.bf16.msra.mxu0 0
        %459 = vmatprep.subr.bf16.mxu0 0
        %460 = vmatpush2.bf16.msra.mxu0 0
        %461 = vmatprep.subr.bf16.mxu0 0
        %462 = vmatpush2.bf16.msra.mxu0 0
        %463 = vmatprep.subr.bf16.mxu0 0
        %464 = vmatpush2.bf16.msra.mxu0 0
        %465 = vmatprep.subr.bf16.mxu0 0
        %466 = vmatpush2.bf16.msra.mxu0 0
        %467 = vmatprep.mubr.bf16.mxu0 0
        %468 = vmatmul.mubr.bf16.gmra.mxu0 %v379
        %v469 = vpop.f32.mrf.mxu0
        %v470 = vadd.f32 %v375, %v469
        %v471 = vpop.f32.mrf.mxu0
        %v472 = vadd.f32 %v375, %v471
        %v473 = vpop.f32.mrf.mxu0
        %v474 = vpop.f32.mrf.mxu0
        %475 = vdwg.mxu0
        %v480 = vcombine.low %v429, %v431
        %v481 = vcombine.low %v470, %v472
        %v483 = vunpack.c.l.s4 1983009808
        %v484 = vunpack.c.0.s8 %v483
        %v485 = vlaneseq
        %v486 = vshrl.u32 %v485, 7
        %v487 = vsub.s32 %v484, %v486
        %v488 = vrot.slane %v480, %v487
        %v490 = vunpack.c.l.s4 1983009808
        %v491 = vunpack.c.0.s8 %v490
        %v492 = vlaneseq
        %v493 = vshrl.u32 %v492, 7
        %v494 = vsub.s32 %v491, %v493
        %v495 = vrot.slane %v481, %v494
        %v496 = vcombine.low %v488, %v495
        %498 = vst [vmem:[%s218] sm:$0xff] %v496
        %s499 = sand.u32 %s137, 1
        %s500 = scalar_lea.sflag [#allocation3], %s499
        %s501 = sand.u32 %s137, 1
        %s502 = smul.addr %s501, 8
        %s503 = scalar_lea.vmem [#allocation2], %s502
        // Predicated region
        $region41: #{tpu_custom_call.1} parent=39 // pred_check
          %p504 = pneg %p147
        $region42: #{tpu_custom_call.1} parent=39 // pred_check_branch
          %506 = sbr.rel (%p504) target = $region44
        $region43: #{tpu_custom_call.1} parent=39 // pred_region
          %s507 = smul.u32 4, %s19
          %s509 = ssub.s32 128, 128
          %510 = vsyncadd %s500, %s509
          %s511 = smul.addr %s507, 32
          %s512 = scalar_lea.hbm %s5, %s511
          %s514 = sshll.u32 %s503, 4
          %s515 = int_to_ptr.vmem [resolvable:$true] %s514
          %517 = dma.vmem_to_hbm [thread:$0]  %s515, 128, %s512, %s500
        $region44: #{tpu_custom_call.1} parent=39 // pred_fallthru
          _
      $region40: #{tpu_custom_call.1} parent=5 // pred_fallthru
        _
      %p518 = scmp.le.s32.totalorder 2, %s14
      // Predicated region
      $region45: #{tpu_custom_call.1} parent=5 // pred_check
        %p519 = pneg %p518
      $region46: #{tpu_custom_call.1} parent=5 // pred_check_branch
        %521 = sbr.rel (%p519) target = $region48
      $region47: #{tpu_custom_call.1} parent=5 // pred_region
        %s522 = ssub.s32 %s14, 2
        // Predicated region
        $region49: #{tpu_custom_call.1} parent=47 // pred_check
          %p523 = pneg %p153
        $region50: #{tpu_custom_call.1} parent=47 // pred_check_branch
          %525 = sbr.rel (%p523) target = $region52
        $region51: #{tpu_custom_call.1} parent=47 // pred_region
          %s526 = sand.u32 %s138, 1
          %s527 = scalar_lea.sflag [#allocation3], %s526
          %s528 = sand.u32 %s138, 1
          %s529 = smul.addr %s528, 8
          %s530 = scalar_lea.vmem [#allocation2], %s529
          %531 = dma.done %s527, 128
        $region52: #{tpu_custom_call.1} parent=47 // pred_fallthru
          _
      $region48: #{tpu_custom_call.1} parent=5 // pred_fallthru
        _
    $region6: #{tpu_custom_call.1} parent=1 // loop_footer
      %s18 = sadd.s32 1, %s14
    $region7: #{tpu_custom_call.1} parent=1 // loop_footer_branch
      %13 = sbr.rel target = $region3
    $region8: #{tpu_custom_call.1} parent=1 // loop_exit
      _
    %532 = vsyncpa [#allocation3], 1
    %s533 = scalar_lea.sflag [#allocation3], 1
    %534 = vsyncpa %s533, 1

</llo_original>
